<compile_context>
chip_gen: v5e
topology: v5e:2x2
jax: 0.10.0
libtpu: 0.0.40
codegen_flags: <defaults>
</compile_context>

<pallas_src>
import functools

import jax
import jax.numpy as jnp
from jax.experimental import pallas as pl
from jax.experimental.pallas import tpu as pltpu


_VMEM = pl.BlockSpec(memory_space=pltpu.MemorySpace.VMEM)
_SMEM = pl.BlockSpec(memory_space=pltpu.MemorySpace.SMEM)


def _deconv_layer_dims(n_channels):
    dims = []
    c = n_channels
    while c > 1:
        dims.append((c, c // 2))
        c //= 2
    return dims


# ------------------------------ parameters ----------------------------------
def init_placenet_params(key, feat_len, n_channels, n_width):
    """PyTorch-layout params: linear (out,in) weight, deconv (Cin,Cout,2,2)."""
    hidden = n_channels * n_width * n_width
    keys = iter(jax.random.split(key, 64))
    params = {
        "linear0_w": 0.05 * jax.random.normal(
            next(keys), (hidden, 2 * feat_len), jnp.float32),
        "linear0_b": 0.05 * jax.random.normal(
            next(keys), (hidden,), jnp.float32),
        "deconv_ws": [],
        "deconv_bs": [],
    }
    for c_in, c_out in _deconv_layer_dims(n_channels):
        params["deconv_ws"].append(
            0.2 * jax.random.normal(next(keys), (c_in, c_out, 2, 2), jnp.float32))
        params["deconv_bs"].append(
            0.2 * jax.random.normal(next(keys), (c_out,), jnp.float32))
    return params


def prepare_kernel_params(params):
    """One-time weight re-layout for the fused kernel (hoisted out of forward).

    Head weight: pre-split (mean/node halves), transposed to (F, hidden), bf16.
    Deconv l: expanded to a block-diagonal W_hat_l of shape (R_{l+1}, R_l),
    R_l = C_l * 4**l, so the whole layer is one MXU matmul on a sublane-dense
    (R_l, n_width**2) slab.  Slab row index = path * C_l + channel, where
    `path` accumulates the (di, dj) upsample offsets (earliest layer most
    significant).  Layer 0 is packed as per-input-channel (R_1, 1) columns for
    the in-kernel broadcast-MAC.
    """
    w0 = jnp.asarray(params["linear0_w"], jnp.float32)          # (hidden, 2F)
    feat_len = w0.shape[1] // 2
    w0_t = w0.T                                                 # (2F, hidden)
    kp = {
        "w0_mean": w0_t[:feat_len].astype(jnp.bfloat16),        # (F, hidden)
        "w0_node": w0_t[feat_len:].astype(jnp.bfloat16),        # (F, hidden)
        "b0": jnp.asarray(params["linear0_b"], jnp.float32).reshape(1, -1),
        "dws": [],
        "dbs": [],
    }
    n_paths = 1
    for l, (w, b) in enumerate(zip(params["deconv_ws"], params["deconv_bs"])):
        w = jnp.asarray(w, jnp.float32)                         # (Cin, Cout, 2, 2)
        c_in, c_out = w.shape[0], w.shape[1]
        # per-path block, rows ordered (di, dj, co):  (4*Cout, Cin)
        blk = jnp.transpose(w, (2, 3, 1, 0)).reshape(4 * c_out, c_in)
        # block-diagonal over the accumulated paths: (P*4*Cout, P*Cin)
        big = jnp.kron(jnp.eye(n_paths, dtype=jnp.float32), blk)
        bias = jnp.tile(jnp.asarray(b, jnp.float32), n_paths * 4).reshape(-1, 1)
        if l == 0:
            # per-input-channel columns: (Cin, R1, 1), wcol[ci] == big[:, ci:ci+1]
            kp["dws"].append(big.T.reshape(c_in, 4 * c_out, 1))
        else:
            kp["dws"].append(big)
        kp["dbs"].append(bias)
        n_paths *= 4
    return kp


# ------------------------------ fused forward --------------------------------
def placenet_forward(kparams, feat, nid, *, n_channels, n_width):
    n_nodes, feat_len = feat.shape
    c0 = n_channels
    s0 = n_width * n_width
    layer_dims = _deconv_layer_dims(n_channels)
    n_layers = len(layer_dims)
    assert n_layers == len(kparams["dws"])
    # R_l = C_l * 4**l : sublane row count of the activation slab after layer l.
    r_dims = [c0] + [co * 4 ** (l + 1) for l, (_, co) in enumerate(layer_dims)]
    r_final = r_dims[-1]
    c_final = layer_dims[-1][1] if n_layers else c0
    inv_n = 1.0 / n_nodes

    def kernel(nid_ref, feat_ref, w0m_ref, w0n_ref, b0_ref, *rest):
        out_ref = rest[-1]
        lrefs = rest[:-1]                      # alternating (w, b) per layer

        # ---- head: relu(cat(mean(feat,0), feat[nid]) @ W0^T + b0) -----------
        f_mean = (jnp.sum(feat_ref[...], axis=0, keepdims=True) * inv_n
                  ).astype(jnp.bfloat16)                          # (1, F)
        f_node = feat_ref[pl.ds(nid_ref[0], 1), :].astype(jnp.bfloat16)
        y = (jnp.dot(f_mean, w0m_ref[...], preferred_element_type=jnp.float32)
             + jnp.dot(f_node, w0n_ref[...], preferred_element_type=jnp.float32)
             + b0_ref[...])
        y = jnp.maximum(y, 0.0)                                   # (1, C0*S0) f32

        if n_layers == 0:
            x = y                                                 # (1, S0); C0 == 1
        else:
            # ---- deconv layer 0: sublane-dense broadcast-MAC ----------------
            # x[doff*C1 + co, s] = b[co] + sum_ci W[ci,co,doff] * y[0, ci*S0+s]
            w_ref, b_ref = lrefs[0], lrefs[1]
            x = b_ref[...] + w_ref[0] * y[:, 0:s0]                # (R1, S0)
            for ci in range(1, c0):
                x = x + w_ref[ci] * y[:, ci * s0:(ci + 1) * s0]
            if n_layers > 1:
                x = jnp.maximum(x, 0.0)

            # ---- deconv layers 1..L-1: one MXU matmul per layer -------------
            for l in range(1, n_layers):
                w_ref, b_ref = lrefs[2 * l], lrefs[2 * l + 1]
                x = (jnp.dot(w_ref[...], x, preferred_element_type=jnp.float32)
                     + b_ref[...])
                if l < n_layers - 1:
                    x = jnp.maximum(x, 0.0)

        # ---- global softmax in registers, ONE dense store --------------------
        m = jnp.max(x)
        e = jnp.exp(x - m)
        denom = jnp.sum(e)
        out_ref[...] = e * (1.0 / denom)       # exact scalar reciprocal

    nid_arr = jnp.asarray(nid, jnp.int32).reshape(1)
    operands = [nid_arr, feat, kparams["w0_mean"], kparams["w0_node"], kparams["b0"]]
    in_specs = [_SMEM, _VMEM, _VMEM, _VMEM, _VMEM]
    for w, b in zip(kparams["dws"], kparams["dbs"]):
        operands += [w, b]
        in_specs += [_VMEM, _VMEM]

    kout = pl.pallas_call(
        kernel,
        out_shape=jax.ShapeDtypeStruct((r_final, s0), jnp.float32),
        in_specs=in_specs,
        out_specs=_VMEM,
    )(*operands)

    # Un-interleave the offset-major rows back to PyTorch's NCHW flatten order.
    # kout rows decompose as (d0i, d0j, d1i, d1j, ..., c); columns as (i0, j0);
    # final spatial i = 2^L*i0 + sum_l 2^(L-1-l)*d_li (same for j).  One tiny
    # (16 KB) fused transpose outside the kernel.
    L = n_layers
    shaped = kout.reshape((2, 2) * L + (c_final, n_width, n_width))
    perm = ((2 * L, 2 * L + 1) + tuple(2 * l for l in range(L))
            + (2 * L + 2,) + tuple(2 * l + 1 for l in range(L)))
    return shaped.transpose(perm).reshape(-1)


# ------------------------------ pure-JAX reference ---------------------------
def placenet_reference(params, feat, nid, n_channels, n_width):
    """Pure-JAX replica of the PyTorch forward (NCHW), for verification."""
    hi = jax.lax.Precision.HIGHEST
    f_mean = jnp.mean(feat, axis=0)
    f_node = feat[nid]
    hvec = jnp.concatenate([f_mean, f_node])
    hvec = jnp.dot(params["linear0_w"], hvec, precision=hi) + params["linear0_b"]
    hvec = jnp.maximum(hvec, 0.0)
    x = hvec.reshape(n_channels, n_width, n_width)
    n_dec = len(params["deconv_ws"])
    for i, (w, b) in enumerate(zip(params["deconv_ws"], params["deconv_bs"])):
        c_out = w.shape[1]
        hh, ww = x.shape[1], x.shape[2]
        y = jnp.einsum("chw,cdij->dhiwj", x, w, precision=hi)
        y = y.reshape(c_out, 2 * hh, 2 * ww) + b[:, None, None]
        if i < n_dec - 1:
            y = jnp.maximum(y, 0.0)
        x = y
    return jax.nn.softmax(x.reshape(-1))


# --------------------------------- main ---------------------------------------
if __name__ == "__main__":
    feat_len, n_channels, n_width = 32, 4, 16
    n_nodes, nid = 8, 3

    key = jax.random.PRNGKey(0)
    k_feat, k_params = jax.random.split(key)
    feat = jax.random.normal(k_feat, (n_nodes, feat_len), jnp.float32)
    params = init_placenet_params(k_params, feat_len, n_channels, n_width)
    kparams = prepare_kernel_params(params)      # one-time weight re-layout

    fwd = jax.jit(functools.partial(placenet_forward,
                                    n_channels=n_channels, n_width=n_width))
    out = fwd(kparams, feat, jnp.int32(nid))
    out = jax.block_until_ready(out)

    ref = placenet_reference(params, feat, nid, n_channels, n_width)
    f_width = n_width * (2 ** len(params["deconv_ws"]))
    assert out.shape == (f_width * f_width,), out.shape
    assert bool(jnp.isfinite(out).all())
    assert abs(float(jnp.sum(out)) - 1.0) < 1e-3          # exact divide now
    max_err = float(jnp.max(jnp.abs(out - ref)))
    assert bool(jnp.allclose(out, ref, rtol=1e-2, atol=1e-6)), (
        "max abs diff vs reference: %e" % max_err)

    print("KERNEL_OK")
</pallas_src>

<mosaic_0001>
module attributes {stable_mosaic.version = 11 : i64} {
  func.func @kernel(%arg0: memref<1xi32, #tpu.memory_space<smem>>, %arg1: memref<8x32xf32, #tpu.memory_space<vmem>>, %arg2: memref<32x1024xbf16, #tpu.memory_space<vmem>>, %arg3: memref<32x1024xbf16, #tpu.memory_space<vmem>>, %arg4: memref<1x1024xf32, #tpu.memory_space<vmem>>, %arg5: memref<4x8x1xf32, #tpu.memory_space<vmem>>, %arg6: memref<8x1xf32, #tpu.memory_space<vmem>>, %arg7: memref<16x8xf32, #tpu.memory_space<vmem>>, %arg8: memref<16x1xf32, #tpu.memory_space<vmem>>, %arg9: memref<16x256xf32, #tpu.memory_space<vmem>>) attributes {dimension_semantics = [], scalar_prefetch = 0 : i64, scratch_operands = 0 : i64, tpu.core_type = #tpu.core_type<tc>} {
    %c0 = arith.constant 0 : index
    %c0_0 = arith.constant 0 : index
    %0 = vector.load %arg1[%c0, %c0_0] : memref<8x32xf32, #tpu.memory_space<vmem>>, vector<8x32xf32>
    %cst = arith.constant dense<0.000000e+00> : vector<32xf32>
    %1 = vector.multi_reduction <add>, %0, %cst [0] : vector<8x32xf32> to vector<32xf32>
    %2 = vector.shape_cast %1 : vector<32xf32> to vector<1x32xf32>
    %cst_1 = arith.constant 1.250000e-01 : f32
    %3 = vector.broadcast %cst_1 : f32 to vector<1x32xf32>
    %4 = arith.mulf %2, %3 : vector<1x32xf32>
    %5 = arith.truncf %4 : vector<1x32xf32> to vector<1x32xbf16>
    %c0_2 = arith.constant 0 : index
    %6 = memref.load %arg0[%c0_2] : memref<1xi32, #tpu.memory_space<smem>>
    %7 = arith.index_cast %6 : i32 to index
    %c0_3 = arith.constant 0 : index
    %8 = vector.load %arg1[%7, %c0_3] : memref<8x32xf32, #tpu.memory_space<vmem>>, vector<1x32xf32>
    %9 = arith.truncf %8 : vector<1x32xf32> to vector<1x32xbf16>
    %c0_4 = arith.constant 0 : index
    %c0_5 = arith.constant 0 : index
    %10 = vector.load %arg2[%c0_4, %c0_5] : memref<32x1024xbf16, #tpu.memory_space<vmem>>, vector<32x1024xbf16>
    %cst_6 = arith.constant dense<0.000000e+00> : vector<1x1024xf32>
    %11 = tpu.matmul %5, %10, %cst_6 {dimension_numbers = #tpu.dot_dimension_numbers<[1], [0], [0], [1], [0, 0, 1, 1], [], []>} : vector<1x32xbf16>, vector<32x1024xbf16>, vector<1x1024xf32> -> vector<1x1024xf32>
    %c0_7 = arith.constant 0 : index
    %c0_8 = arith.constant 0 : index
    %12 = vector.load %arg3[%c0_7, %c0_8] : memref<32x1024xbf16, #tpu.memory_space<vmem>>, vector<32x1024xbf16>
    %cst_9 = arith.constant dense<0.000000e+00> : vector<1x1024xf32>
    %13 = tpu.matmul %9, %12, %cst_9 {dimension_numbers = #tpu.dot_dimension_numbers<[1], [0], [0], [1], [0, 0, 1, 1], [], []>} : vector<1x32xbf16>, vector<32x1024xbf16>, vector<1x1024xf32> -> vector<1x1024xf32>
    %14 = arith.addf %11, %13 : vector<1x1024xf32>
    %c0_10 = arith.constant 0 : index
    %c0_11 = arith.constant 0 : index
    %15 = vector.load %arg4[%c0_10, %c0_11] : memref<1x1024xf32, #tpu.memory_space<vmem>>, vector<1x1024xf32>
    %16 = arith.addf %14, %15 : vector<1x1024xf32>
    %cst_12 = arith.constant 0.000000e+00 : f32
    %17 = vector.broadcast %cst_12 : f32 to vector<1x1024xf32>
    %18 = arith.maximumf %16, %17 : vector<1x1024xf32>
    %c0_13 = arith.constant 0 : index
    %c0_14 = arith.constant 0 : index
    %19 = vector.load %arg6[%c0_13, %c0_14] : memref<8x1xf32, #tpu.memory_space<vmem>>, vector<8x1xf32>
    %c0_15 = arith.constant 0 : index
    %c0_16 = arith.constant 0 : index
    %c0_17 = arith.constant 0 : index
    %20 = vector.load %arg5[%c0_15, %c0_16, %c0_17] : memref<4x8x1xf32, #tpu.memory_space<vmem>>, vector<1x8x1xf32>
    %21 = vector.shape_cast %20 : vector<1x8x1xf32> to vector<8x1xf32>
    %22 = vector.extract_strided_slice %18 {offsets = [0, 0], sizes = [1, 256], strides = [1, 1]} : vector<1x1024xf32> to vector<1x256xf32>
    %23 = vector.broadcast %21 : vector<8x1xf32> to vector<8x256xf32>
    %24 = vector.broadcast %22 : vector<1x256xf32> to vector<8x256xf32>
    %25 = arith.mulf %23, %24 : vector<8x256xf32>
    %26 = vector.broadcast %19 : vector<8x1xf32> to vector<8x256xf32>
    %27 = arith.addf %26, %25 : vector<8x256xf32>
    %c1 = arith.constant 1 : index
    %c0_18 = arith.constant 0 : index
    %c0_19 = arith.constant 0 : index
    %28 = vector.load %arg5[%c1, %c0_18, %c0_19] : memref<4x8x1xf32, #tpu.memory_space<vmem>>, vector<1x8x1xf32>
    %29 = vector.shape_cast %28 : vector<1x8x1xf32> to vector<8x1xf32>
    %30 = vector.extract_strided_slice %18 {offsets = [0, 256], sizes = [1, 256], strides = [1, 1]} : vector<1x1024xf32> to vector<1x256xf32>
    %31 = vector.broadcast %29 : vector<8x1xf32> to vector<8x256xf32>
    %32 = vector.broadcast %30 : vector<1x256xf32> to vector<8x256xf32>
    %33 = arith.mulf %31, %32 : vector<8x256xf32>
    %34 = arith.addf %27, %33 : vector<8x256xf32>
    %c2 = arith.constant 2 : index
    %c0_20 = arith.constant 0 : index
    %c0_21 = arith.constant 0 : index
    %35 = vector.load %arg5[%c2, %c0_20, %c0_21] : memref<4x8x1xf32, #tpu.memory_space<vmem>>, vector<1x8x1xf32>
    %36 = vector.shape_cast %35 : vector<1x8x1xf32> to vector<8x1xf32>
    %37 = vector.extract_strided_slice %18 {offsets = [0, 512], sizes = [1, 256], strides = [1, 1]} : vector<1x1024xf32> to vector<1x256xf32>
    %38 = vector.broadcast %36 : vector<8x1xf32> to vector<8x256xf32>
    %39 = vector.broadcast %37 : vector<1x256xf32> to vector<8x256xf32>
    %40 = arith.mulf %38, %39 : vector<8x256xf32>
    %41 = arith.addf %34, %40 : vector<8x256xf32>
    %c3 = arith.constant 3 : index
    %c0_22 = arith.constant 0 : index
    %c0_23 = arith.constant 0 : index
    %42 = vector.load %arg5[%c3, %c0_22, %c0_23] : memref<4x8x1xf32, #tpu.memory_space<vmem>>, vector<1x8x1xf32>
    %43 = vector.shape_cast %42 : vector<1x8x1xf32> to vector<8x1xf32>
    %44 = vector.extract_strided_slice %18 {offsets = [0, 768], sizes = [1, 256], strides = [1, 1]} : vector<1x1024xf32> to vector<1x256xf32>
    %45 = vector.broadcast %43 : vector<8x1xf32> to vector<8x256xf32>
    %46 = vector.broadcast %44 : vector<1x256xf32> to vector<8x256xf32>
    %47 = arith.mulf %45, %46 : vector<8x256xf32>
    %48 = arith.addf %41, %47 : vector<8x256xf32>
    %cst_24 = arith.constant 0.000000e+00 : f32
    %49 = vector.broadcast %cst_24 : f32 to vector<8x256xf32>
    %50 = arith.maximumf %48, %49 : vector<8x256xf32>
    %c0_25 = arith.constant 0 : index
    %c0_26 = arith.constant 0 : index
    %51 = vector.load %arg7[%c0_25, %c0_26] : memref<16x8xf32, #tpu.memory_space<vmem>>, vector<16x8xf32>
    %cst_27 = arith.constant dense<0.000000e+00> : vector<16x256xf32>
    %52 = tpu.matmul %51, %50, %cst_27 {dimension_numbers = #tpu.dot_dimension_numbers<[1], [0], [0], [1], [0, 0, 1, 1], [], []>} : vector<16x8xf32>, vector<8x256xf32>, vector<16x256xf32> -> vector<16x256xf32>
    %c0_28 = arith.constant 0 : index
    %c0_29 = arith.constant 0 : index
    %53 = vector.load %arg8[%c0_28, %c0_29] : memref<16x1xf32, #tpu.memory_space<vmem>>, vector<16x1xf32>
    %54 = vector.broadcast %53 : vector<16x1xf32> to vector<16x256xf32>
    %55 = arith.addf %52, %54 : vector<16x256xf32>
    %56 = vector.shape_cast %55 : vector<16x256xf32> to vector<1x16x256xf32>
    %cst_30 = arith.constant dense<0xFF800000> : vector<1xf32>
    %57 = vector.multi_reduction <maximumf>, %56, %cst_30 [1, 2] : vector<1x16x256xf32> to vector<1xf32>
    %58 = vector.shape_cast %57 : vector<1xf32> to vector<1x1x1xf32>
    %59 = vector.extract %58[0, 0, 0] : f32 from vector<1x1x1xf32>
    %60 = vector.broadcast %59 : f32 to vector<16x256xf32>
    %61 = arith.subf %55, %60 : vector<16x256xf32>
    %62 = math.exp %61 : vector<16x256xf32>
    %63 = vector.shape_cast %62 : vector<16x256xf32> to vector<1x16x256xf32>
    %cst_31 = arith.constant dense<0.000000e+00> : vector<1xf32>
    %64 = vector.multi_reduction <add>, %63, %cst_31 [1, 2] : vector<1x16x256xf32> to vector<1xf32>
    %65 = vector.shape_cast %64 : vector<1xf32> to vector<1x1x1xf32>
    %66 = vector.extract %65[0, 0, 0] : f32 from vector<1x1x1xf32>
    %cst_32 = arith.constant 1.000000e+00 : f32
    %67 = arith.divf %cst_32, %66 : f32
    %68 = vector.broadcast %67 : f32 to vector<16x256xf32>
    %69 = arith.mulf %62, %68 : vector<16x256xf32>
    %c0_33 = arith.constant 0 : index
    %c0_34 = arith.constant 0 : index
    %70 = vector.load %arg9[%c0_33, %c0_34] : memref<16x256xf32, #tpu.memory_space<vmem>>, vector<16x256xf32>
    tpu.vector_store %arg9[%c0_33, %c0_34], %69 {strides = array<i32>} : memref<16x256xf32, #tpu.memory_space<vmem>>, vector<16x256xf32>,
    return
  }
}

</mosaic_0001>

<llo_original>
// kernel: placenet_forward.1
$region0: #{placenet_forward.1}
  #allocation0 [shape = 'u32[]', space=smem, size = 0x4, offset = 0x4, fixed_abs, tag = 'smem constant byte address 0x4 - core index']
  #allocation1 [shape = 'u32[72,128]{1,0:T(1,128)}', space=vmem, size = 0x9000, scoped, tag = 'internal scratch']
  #allocation2 [shape = 's32[1]{0:T(128)S(6)}', space=smem, size = 0x200, scoped, tag = 'scoped memory for placenet_forward.1']
  %s0 = inlined_call_operand.<no memory space> [shape: s32[1], index: 0, kind: input, shape index: {}]
  %s1 = inlined_call_operand.vmem [shape: f32[8,32], index: 1, kind: input, shape index: {}]
  %s2 = inlined_call_operand.hbm [shape: bf16[32,1024], index: 2, kind: input, shape index: {}]
  %s3 = inlined_call_operand.hbm [shape: bf16[32,1024], index: 3, kind: input, shape index: {}]
  %s4 = inlined_call_operand.vmem [shape: f32[1,1024], index: 4, kind: input, shape index: {}]
  %s5 = inlined_call_operand.vmem [shape: f32[4,8,1], index: 5, kind: input, shape index: {}]
  %s6 = inlined_call_operand.vmem [shape: f32[8,1], index: 6, kind: input, shape index: {}]
  %s7 = inlined_call_operand.vmem [shape: f32[16,8], index: 7, kind: input, shape index: {}]
  %s8 = inlined_call_operand.vmem [shape: f32[16,1], index: 8, kind: input, shape index: {}]
  %s9 = inlined_call_operand.vmem [shape: f32[16,256], index: 9, kind: output, shape index: {}]
  %s10 = sld [smem:[#allocation0]]
  $region54: #{placenet_forward.1} parent=0
    _
  %s12 = ssub.s32 1, %s10
  %s13 = scalar_select 0, %s12, %s10
  %14 = sst [smem:[#allocation2]] %s0
  $region1: #{placenet_forward.1} parent=0
    #allocation3 [shape = 'u8[65536]{0}', space=vmem, size = 0x10000, scoped, tag = 'input window, operand 2, single buffered']
    #allocation4 [shape = 's32[1]{0}', space=sflag, size = 0x4, scoped, tag = 'scoped memory for placenet_forward.1']
    #allocation5 [shape = 'u8[65536]{0}', space=vmem, size = 0x10000, scoped, tag = 'input window, operand 3, single buffered']
    #allocation6 [shape = 's32[1]{0}', space=sflag, size = 0x4, scoped, tag = 'scoped memory for placenet_forward.1']
    %15 = vsyncpa [#allocation4], 0
    %16 = vsyncpa [#allocation6], 0
    // Predicated region
    $region2: #{placenet_forward.1} parent=1 // pred_check
      _
    $region3: #{placenet_forward.1} parent=1 // pred_check_branch
      %18 = sbr.rel (0) target = $region5
    $region4: #{placenet_forward.1} parent=1 // pred_region
      _
    $region5: #{placenet_forward.1} parent=1 // pred_fallthru
      _
    // Predicated region
    $region6: #{placenet_forward.1} parent=1 // pred_check
      _
    $region7: #{placenet_forward.1} parent=1 // pred_check_branch
      %20 = sbr.rel (0) target = $region9
    $region8: #{placenet_forward.1} parent=1 // pred_region
      _
    $region9: #{placenet_forward.1} parent=1 // pred_fallthru
      _
    // Predicated region
    $region10: #{placenet_forward.1} parent=1 // pred_check
      _
    $region11: #{placenet_forward.1} parent=1 // pred_check_branch
      %22 = sbr.rel (0) target = $region13
    $region12: #{placenet_forward.1} parent=1 // pred_region
      %24 = vsyncadd [#allocation4], 0
      %s25 = sshll.u32 %s2, 4
      %s26 = int_to_ptr.hbm [resolvable:$true] %s25
      %s27 = sshll.u32 [#allocation3], 4
      %s28 = int_to_ptr.vmem [resolvable:$true] %s27
      %33 = dma.hbm_to_vmem [thread:$0]  %s26, 2048, %s28, [#allocation4], 512, 512, 32
    $region13: #{placenet_forward.1} parent=1 // pred_fallthru
      _
    // Predicated region
    $region14: #{placenet_forward.1} parent=1 // pred_check
      _
    $region15: #{placenet_forward.1} parent=1 // pred_check_branch
      %35 = sbr.rel (0) target = $region17
    $region16: #{placenet_forward.1} parent=1 // pred_region
      %37 = vsyncadd [#allocation6], 0
      %s38 = sshll.u32 %s3, 4
      %s39 = int_to_ptr.hbm [resolvable:$true] %s38
      %s40 = sshll.u32 [#allocation5], 4
      %s41 = int_to_ptr.vmem [resolvable:$true] %s40
      %46 = dma.hbm_to_vmem [thread:$0]  %s39, 2048, %s41, [#allocation6], 512, 512, 32
    $region17: #{placenet_forward.1} parent=1 // pred_fallthru
      _
    // Predicated region
    $region18: #{placenet_forward.1} parent=1 // pred_check
      _
    $region19: #{placenet_forward.1} parent=1 // pred_check_branch
      %48 = sbr.rel (0) target = $region21
    $region20: #{placenet_forward.1} parent=1 // pred_region
      _
    $region21: #{placenet_forward.1} parent=1 // pred_fallthru
      _
    // Predicated region
    $region22: #{placenet_forward.1} parent=1 // pred_check
      _
    $region23: #{placenet_forward.1} parent=1 // pred_check_branch
      %50 = sbr.rel (0) target = $region25
    $region24: #{placenet_forward.1} parent=1 // pred_region
      _
    $region25: #{placenet_forward.1} parent=1 // pred_fallthru
      _
    // Predicated region
    $region26: #{placenet_forward.1} parent=1 // pred_check
      _
    $region27: #{placenet_forward.1} parent=1 // pred_check_branch
      %52 = sbr.rel (0) target = $region29
    $region28: #{placenet_forward.1} parent=1 // pred_region
      _
    $region29: #{placenet_forward.1} parent=1 // pred_fallthru
      _
    // Predicated region
    $region30: #{placenet_forward.1} parent=1 // pred_check
      _
    $region31: #{placenet_forward.1} parent=1 // pred_check_branch
      %54 = sbr.rel (0) target = $region33
    $region32: #{placenet_forward.1} parent=1 // pred_region
      _
    $region33: #{placenet_forward.1} parent=1 // pred_fallthru
      _
    // Predicated region
    $region34: #{placenet_forward.1} parent=1 // pred_check
      _
    $region35: #{placenet_forward.1} parent=1 // pred_check_branch
      %56 = sbr.rel (0) target = $region37
    $region36: #{placenet_forward.1} parent=1 // pred_region
      _
    $region37: #{placenet_forward.1} parent=1 // pred_fallthru
      _
    // Predicated region
    $region38: #{placenet_forward.1} parent=1 // pred_check
      _
    $region39: #{placenet_forward.1} parent=1 // pred_check_branch
      %58 = sbr.rel (0) target = $region41
    $region40: #{placenet_forward.1} parent=1 // pred_region
      %60 = dma.done [#allocation4], 2048
    $region41: #{placenet_forward.1} parent=1 // pred_fallthru
      _
    // Predicated region
    $region42: #{placenet_forward.1} parent=1 // pred_check
      _
    $region43: #{placenet_forward.1} parent=1 // pred_check_branch
      %62 = sbr.rel (0) target = $region45
    $region44: #{placenet_forward.1} parent=1 // pred_region
      %64 = dma.done [#allocation6], 2048
    $region45: #{placenet_forward.1} parent=1 // pred_fallthru
      _
    %v66 = vld [vmem:[%s1] sm:$0xff]
    %vm67 = vcmask 261120
    %v68 = vsel %vm67, %v66, 0.0
    %v69 = vrot.slane %v68, 4
    %v70 = vadd.f32 %v68, %v69
    %v71 = vrot.slane %v70, 2
    %v72 = vadd.f32 %v70, %v71
    %v73 = vrot.slane %v72, 1
    %v74 = vadd.f32 %v72, %v73
    %v75 = vmul.f32 %v74, 0.125
    %v76 = vpack.c.bf16 %v75, %v75
    %s77 = sld [smem:[#allocation2]]
    %s78 = scalar_lea.vmem %s1, %s77
    %v79 = vld [vmem:[%s78] sm:$0x1]
    %v80 = vpack.c.bf16 %v79, %v79
    %v81 = vld [vmem:[#allocation3] sm:$0xff]
    %v82 = vld [vmem:[#allocation3 + $0x8] sm:$0xff]
    %v83 = vld [vmem:[#allocation3 + $0x10] sm:$0xff]
    %v84 = vld [vmem:[#allocation3 + $0x18] sm:$0xff]
    %v85 = vld [vmem:[#allocation3 + $0x20] sm:$0xff]
    %v86 = vld [vmem:[#allocation3 + $0x28] sm:$0xff]
    %v87 = vld [vmem:[#allocation3 + $0x30] sm:$0xff]
    %v88 = vld [vmem:[#allocation3 + $0x38] sm:$0xff]
    %v89 = vld [vmem:[#allocation3 + $0x40] sm:$0xff]
    %v90 = vld [vmem:[#allocation3 + $0x48] sm:$0xff]
    %v91 = vld [vmem:[#allocation3 + $0x50] sm:$0xff]
    %v92 = vld [vmem:[#allocation3 + $0x58] sm:$0xff]
    %v93 = vld [vmem:[#allocation3 + $0x60] sm:$0xff]
    %v94 = vld [vmem:[#allocation3 + $0x68] sm:$0xff]
    %v95 = vld [vmem:[#allocation3 + $0x70] sm:$0xff]
    %v96 = vld [vmem:[#allocation3 + $0x78] sm:$0xff]
    %v97 = vld [vmem:[#allocation5] sm:$0xff]
    %v98 = vld [vmem:[#allocation5 + $0x8] sm:$0xff]
    %v99 = vld [vmem:[#allocation5 + $0x10] sm:$0xff]
    %v100 = vld [vmem:[#allocation5 + $0x18] sm:$0xff]
    %v101 = vld [vmem:[#allocation5 + $0x20] sm:$0xff]
    %v102 = vld [vmem:[#allocation5 + $0x28] sm:$0xff]
    %v103 = vld [vmem:[#allocation5 + $0x30] sm:$0xff]
    %v104 = vld [vmem:[#allocation5 + $0x38] sm:$0xff]
    %v105 = vld [vmem:[#allocation5 + $0x40] sm:$0xff]
    %v106 = vld [vmem:[#allocation5 + $0x48] sm:$0xff]
    %v107 = vld [vmem:[#allocation5 + $0x50] sm:$0xff]
    %v108 = vld [vmem:[#allocation5 + $0x58] sm:$0xff]
    %v109 = vld [vmem:[#allocation5 + $0x60] sm:$0xff]
    %v110 = vld [vmem:[#allocation5 + $0x68] sm:$0xff]
    %v111 = vld [vmem:[#allocation5 + $0x70] sm:$0xff]
    %v112 = vld [vmem:[#allocation5 + $0x78] sm:$0xff]
    %v129 = vunpack.c.l.b16 %v97
    %v130 = vunpack.c.h.b16 %v97
    %v131 = vunpack.c.l.b16 %v98
    %v132 = vunpack.c.h.b16 %v98
    %v133 = vunpack.c.l.b16 %v99
    %v134 = vunpack.c.h.b16 %v99
    %v135 = vunpack.c.l.b16 %v100
    %v136 = vunpack.c.h.b16 %v100
    %v137 = vunpack.c.l.b16 %v101
    %v138 = vunpack.c.h.b16 %v101
    %v139 = vunpack.c.l.b16 %v102
    %v140 = vunpack.c.h.b16 %v102
    %v141 = vunpack.c.l.b16 %v103
    %v142 = vunpack.c.h.b16 %v103
    %v143 = vunpack.c.l.b16 %v104
    %v144 = vunpack.c.h.b16 %v104
    %v145 = vunpack.c.l.b16 %v105
    %v146 = vunpack.c.h.b16 %v105
    %v147 = vunpack.c.l.b16 %v106
    %v148 = vunpack.c.h.b16 %v106
    %v149 = vunpack.c.l.b16 %v107
    %v150 = vunpack.c.h.b16 %v107
    %v151 = vunpack.c.l.b16 %v108
    %v152 = vunpack.c.h.b16 %v108
    %v153 = vunpack.c.l.b16 %v109
    %v154 = vunpack.c.h.b16 %v109
    %v155 = vunpack.c.l.b16 %v110
    %v156 = vunpack.c.h.b16 %v110
    %v157 = vunpack.c.l.b16 %v111
    %v158 = vunpack.c.h.b16 %v111
    %v159 = vunpack.c.l.b16 %v112
    %v160 = vunpack.c.h.b16 %v112
    %v161 = vpack.c.b16 %v137, %v129
    %v162 = vpack.c.b16 %v138, %v130
    %v163 = vpack.c.b16 %v139, %v131
    %v164 = vpack.c.b16 %v140, %v132
    %v165 = vpack.c.b16 %v141, %v133
    %v166 = vpack.c.b16 %v142, %v134
    %v167 = vpack.c.b16 %v143, %v135
    %v168 = vpack.c.b16 %v144, %v136
    %v169 = vpack.c.b16 %v153, %v145
    %v170 = vpack.c.b16 %v154, %v146
    %v171 = vpack.c.b16 %v155, %v147
    %v172 = vpack.c.b16 %v156, %v148
    %v173 = vpack.c.b16 %v157, %v149
    %v174 = vpack.c.b16 %v158, %v150
    %v175 = vpack.c.b16 %v159, %v151
    %v176 = vpack.c.b16 %v160, %v152
    %v194 = vsel %vm67, %v80, 0
    %196 = vmatpush.bf16.msra.mxu0 0
    %197 = vmatpush.bf16.msra.mxu0 0
    %198 = vmatpush.bf16.msra.mxu0 0
    %199 = vmatpush.bf16.msra.mxu0 0
    %200 = vmatpush.bf16.msra.mxu0 0
    %201 = vmatpush.bf16.msra.mxu0 0
    %202 = vmatpush.bf16.msra.mxu0 %v169
    %203 = vmatpush.bf16.msra.mxu0 %v161
    %204 = vmatmul.bf16.gmra.mxu0 %v194
    %v205 = vpop.f32.mrf.mxu0
    %v206 = vadd.f32 0.0, %v205
    %v207 = vpop.f32.mrf.mxu0
    %208 = vdwg.mxu0
    %209 = vmatpush.bf16.msra.mxu0 0
    %210 = vmatpush.bf16.msra.mxu0 0
    %211 = vmatpush.bf16.msra.mxu0 0
    %212 = vmatpush.bf16.msra.mxu0 0
    %213 = vmatpush.bf16.msra.mxu0 0
    %214 = vmatpush.bf16.msra.mxu0 0
    %215 = vmatpush.bf16.msra.mxu0 %v170
    %216 = vmatpush.bf16.msra.mxu0 %v162
    %217 = vmatmul.bf16.gmra.mxu0 %v194
    %v218 = vpop.f32.mrf.mxu0
    %v219 = vadd.f32 0.0, %v218
    %v220 = vpop.f32.mrf.mxu0
    %221 = vdwg.mxu0
    %222 = vmatpush.bf16.msra.mxu0 0
    %223 = vmatpush.bf16.msra.mxu0 0
    %224 = vmatpush.bf16.msra.mxu0 0
    %225 = vmatpush.bf16.msra.mxu0 0
    %226 = vmatpush.bf16.msra.mxu0 0
    %227 = vmatpush.bf16.msra.mxu0 0
    %228 = vmatpush.bf16.msra.mxu0 %v171
    %229 = vmatpush.bf16.msra.mxu0 %v163
    %230 = vmatmul.bf16.gmra.mxu0 %v194
    %v231 = vpop.f32.mrf.mxu0
    %v232 = vadd.f32 0.0, %v231
    %v233 = vpop.f32.mrf.mxu0
    %234 = vdwg.mxu0
    %235 = vmatpush.bf16.msra.mxu0 0
    %236 = vmatpush.bf16.msra.mxu0 0
    %237 = vmatpush.bf16.msra.mxu0 0
    %238 = vmatpush.bf16.msra.mxu0 0
    %239 = vmatpush.bf16.msra.mxu0 0
    %240 = vmatpush.bf16.msra.mxu0 0
    %241 = vmatpush.bf16.msra.mxu0 %v172
    %242 = vmatpush.bf16.msra.mxu0 %v164
    %243 = vmatmul.bf16.gmra.mxu0 %v194
    %v244 = vpop.f32.mrf.mxu0
    %v245 = vadd.f32 0.0, %v244
    %v246 = vpop.f32.mrf.mxu0
    %247 = vdwg.mxu0
    %248 = vmatpush.bf16.msra.mxu0 0
    %249 = vmatpush.bf16.msra.mxu0 0
    %250 = vmatpush.bf16.msra.mxu0 0
    %251 = vmatpush.bf16.msra.mxu0 0
    %252 = vmatpush.bf16.msra.mxu0 0
    %253 = vmatpush.bf16.msra.mxu0 0
    %254 = vmatpush.bf16.msra.mxu0 %v173
    %255 = vmatpush.bf16.msra.mxu0 %v165
    %256 = vmatmul.bf16.gmra.mxu0 %v194
    %v257 = vpop.f32.mrf.mxu0
    %v258 = vadd.f32 0.0, %v257
    %v259 = vpop.f32.mrf.mxu0
    %260 = vdwg.mxu0
    %261 = vmatpush.bf16.msra.mxu0 0
    %262 = vmatpush.bf16.msra.mxu0 0
    %263 = vmatpush.bf16.msra.mxu0 0
    %264 = vmatpush.bf16.msra.mxu0 0
    %265 = vmatpush.bf16.msra.mxu0 0
    %266 = vmatpush.bf16.msra.mxu0 0
    %267 = vmatpush.bf16.msra.mxu0 %v174
    %268 = vmatpush.bf16.msra.mxu0 %v166
    %269 = vmatmul.bf16.gmra.mxu0 %v194
    %v270 = vpop.f32.mrf.mxu0
    %v271 = vadd.f32 0.0, %v270
    %v272 = vpop.f32.mrf.mxu0
    %273 = vdwg.mxu0
    %274 = vmatpush.bf16.msra.mxu0 0
    %275 = vmatpush.bf16.msra.mxu0 0
    %276 = vmatpush.bf16.msra.mxu0 0
    %277 = vmatpush.bf16.msra.mxu0 0
    %278 = vmatpush.bf16.msra.mxu0 0
    %279 = vmatpush.bf16.msra.mxu0 0
    %280 = vmatpush.bf16.msra.mxu0 %v175
    %281 = vmatpush.bf16.msra.mxu0 %v167
    %282 = vmatmul.bf16.gmra.mxu0 %v194
    %v283 = vpop.f32.mrf.mxu0
    %v284 = vadd.f32 0.0, %v283
    %v285 = vpop.f32.mrf.mxu0
    %286 = vdwg.mxu0
    %287 = vmatpush.bf16.msra.mxu0 0
    %288 = vmatpush.bf16.msra.mxu0 0
    %289 = vmatpush.bf16.msra.mxu0 0
    %290 = vmatpush.bf16.msra.mxu0 0
    %291 = vmatpush.bf16.msra.mxu0 0
    %292 = vmatpush.bf16.msra.mxu0 0
    %293 = vmatpush.bf16.msra.mxu0 %v176
    %294 = vmatpush.bf16.msra.mxu0 %v168
    %295 = vmatmul.bf16.gmra.mxu0 %v194
    %v296 = vpop.f32.mrf.mxu0
    %v297 = vadd.f32 0.0, %v296
    %v298 = vpop.f32.mrf.mxu0
    %299 = vdwg.mxu0
    %v316 = vunpack.c.l.b16 %v81
    %v317 = vunpack.c.h.b16 %v81
    %v318 = vunpack.c.l.b16 %v82
    %v319 = vunpack.c.h.b16 %v82
    %v320 = vunpack.c.l.b16 %v83
    %v321 = vunpack.c.h.b16 %v83
    %v322 = vunpack.c.l.b16 %v84
    %v323 = vunpack.c.h.b16 %v84
    %v324 = vunpack.c.l.b16 %v85
    %v325 = vunpack.c.h.b16 %v85
    %v326 = vunpack.c.l.b16 %v86
    %v327 = vunpack.c.h.b16 %v86
    %v328 = vunpack.c.l.b16 %v87
    %v329 = vunpack.c.h.b16 %v87
    %v330 = vunpack.c.l.b16 %v88
    %v331 = vunpack.c.h.b16 %v88
    %v332 = vunpack.c.l.b16 %v89
    %v333 = vunpack.c.h.b16 %v89
    %v334 = vunpack.c.l.b16 %v90
    %v335 = vunpack.c.h.b16 %v90
    %v336 = vunpack.c.l.b16 %v91
    %v337 = vunpack.c.h.b16 %v91
    %v338 = vunpack.c.l.b16 %v92
    %v339 = vunpack.c.h.b16 %v92
    %v340 = vunpack.c.l.b16 %v93
    %v341 = vunpack.c.h.b16 %v93
    %v342 = vunpack.c.l.b16 %v94
    %v343 = vunpack.c.h.b16 %v94
    %v344 = vunpack.c.l.b16 %v95
    %v345 = vunpack.c.h.b16 %v95
    %v346 = vunpack.c.l.b16 %v96
    %v347 = vunpack.c.h.b16 %v96
    %v348 = vpack.c.b16 %v324, %v316
    %v349 = vpack.c.b16 %v325, %v317
    %v350 = vpack.c.b16 %v326, %v318
    %v351 = vpack.c.b16 %v327, %v319
    %v352 = vpack.c.b16 %v328, %v320
    %v353 = vpack.c.b16 %v329, %v321
    %v354 = vpack.c.b16 %v330, %v322
    %v355 = vpack.c.b16 %v331, %v323
    %v356 = vpack.c.b16 %v340, %v332
    %v357 = vpack.c.b16 %v341, %v333
    %v358 = vpack.c.b16 %v342, %v334
    %v359 = vpack.c.b16 %v343, %v335
    %v360 = vpack.c.b16 %v344, %v336
    %v361 = vpack.c.b16 %v345, %v337
    %v362 = vpack.c.b16 %v346, %v338
    %v363 = vpack.c.b16 %v347, %v339
    %v381 = vsel %vm67, %v76, 0
    %383 = vmatpush.bf16.msra.mxu0 0
    %384 = vmatpush.bf16.msra.mxu0 0
    %385 = vmatpush.bf16.msra.mxu0 0
    %386 = vmatpush.bf16.msra.mxu0 0
    %387 = vmatpush.bf16.msra.mxu0 0
    %388 = vmatpush.bf16.msra.mxu0 0
    %389 = vmatpush.bf16.msra.mxu0 %v356
    %390 = vmatpush.bf16.msra.mxu0 %v348
    %391 = vmatmul.bf16.gmra.mxu0 %v381
    %v392 = vpop.f32.mrf.mxu0
    %v393 = vadd.f32 %v206, %v392
    %v394 = vpop.f32.mrf.mxu0
    %395 = vdwg.mxu0
    %396 = vmatpush.bf16.msra.mxu0 0
    %397 = vmatpush.bf16.msra.mxu0 0
    %398 = vmatpush.bf16.msra.mxu0 0
    %399 = vmatpush.bf16.msra.mxu0 0
    %400 = vmatpush.bf16.msra.mxu0 0
    %401 = vmatpush.bf16.msra.mxu0 0
    %402 = vmatpush.bf16.msra.mxu0 %v357
    %403 = vmatpush.bf16.msra.mxu0 %v349
    %404 = vmatmul.bf16.gmra.mxu0 %v381
    %v405 = vpop.f32.mrf.mxu0
    %v406 = vadd.f32 %v219, %v405
    %v407 = vpop.f32.mrf.mxu0
    %408 = vdwg.mxu0
    %409 = vmatpush.bf16.msra.mxu0 0
    %410 = vmatpush.bf16.msra.mxu0 0
    %411 = vmatpush.bf16.msra.mxu0 0
    %412 = vmatpush.bf16.msra.mxu0 0
    %413 = vmatpush.bf16.msra.mxu0 0
    %414 = vmatpush.bf16.msra.mxu0 0
    %415 = vmatpush.bf16.msra.mxu0 %v358
    %416 = vmatpush.bf16.msra.mxu0 %v350
    %417 = vmatmul.bf16.gmra.mxu0 %v381
    %v418 = vpop.f32.mrf.mxu0
    %v419 = vadd.f32 %v232, %v418
    %v420 = vpop.f32.mrf.mxu0
    %421 = vdwg.mxu0
    %422 = vmatpush.bf16.msra.mxu0 0
    %423 = vmatpush.bf16.msra.mxu0 0
    %424 = vmatpush.bf16.msra.mxu0 0
    %425 = vmatpush.bf16.msra.mxu0 0
    %426 = vmatpush.bf16.msra.mxu0 0
    %427 = vmatpush.bf16.msra.mxu0 0
    %428 = vmatpush.bf16.msra.mxu0 %v359
    %429 = vmatpush.bf16.msra.mxu0 %v351
    %430 = vmatmul.bf16.gmra.mxu0 %v381
    %v431 = vpop.f32.mrf.mxu0
    %v432 = vadd.f32 %v245, %v431
    %v433 = vpop.f32.mrf.mxu0
    %434 = vdwg.mxu0
    %435 = vmatpush.bf16.msra.mxu0 0
    %436 = vmatpush.bf16.msra.mxu0 0
    %437 = vmatpush.bf16.msra.mxu0 0
    %438 = vmatpush.bf16.msra.mxu0 0
    %439 = vmatpush.bf16.msra.mxu0 0
    %440 = vmatpush.bf16.msra.mxu0 0
    %441 = vmatpush.bf16.msra.mxu0 %v360
    %442 = vmatpush.bf16.msra.mxu0 %v352
    %443 = vmatmul.bf16.gmra.mxu0 %v381
    %v444 = vpop.f32.mrf.mxu0
    %v445 = vadd.f32 %v258, %v444
    %v446 = vpop.f32.mrf.mxu0
    %447 = vdwg.mxu0
    %448 = vmatpush.bf16.msra.mxu0 0
    %449 = vmatpush.bf16.msra.mxu0 0
    %450 = vmatpush.bf16.msra.mxu0 0
    %451 = vmatpush.bf16.msra.mxu0 0
    %452 = vmatpush.bf16.msra.mxu0 0
    %453 = vmatpush.bf16.msra.mxu0 0
    %454 = vmatpush.bf16.msra.mxu0 %v361
    %455 = vmatpush.bf16.msra.mxu0 %v353
    %456 = vmatmul.bf16.gmra.mxu0 %v381
    %v457 = vpop.f32.mrf.mxu0
    %v458 = vadd.f32 %v271, %v457
    %v459 = vpop.f32.mrf.mxu0
    %460 = vdwg.mxu0
    %461 = vmatpush.bf16.msra.mxu0 0
    %462 = vmatpush.bf16.msra.mxu0 0
    %463 = vmatpush.bf16.msra.mxu0 0
    %464 = vmatpush.bf16.msra.mxu0 0
    %465 = vmatpush.bf16.msra.mxu0 0
    %466 = vmatpush.bf16.msra.mxu0 0
    %467 = vmatpush.bf16.msra.mxu0 %v362
    %468 = vmatpush.bf16.msra.mxu0 %v354
    %469 = vmatmul.bf16.gmra.mxu0 %v381
    %v470 = vpop.f32.mrf.mxu0
    %v471 = vadd.f32 %v284, %v470
    %v472 = vpop.f32.mrf.mxu0
    %473 = vdwg.mxu0
    %474 = vmatpush.bf16.msra.mxu0 0
    %475 = vmatpush.bf16.msra.mxu0 0
    %476 = vmatpush.bf16.msra.mxu0 0
    %477 = vmatpush.bf16.msra.mxu0 0
    %478 = vmatpush.bf16.msra.mxu0 0
    %479 = vmatpush.bf16.msra.mxu0 0
    %480 = vmatpush.bf16.msra.mxu0 %v363
    %481 = vmatpush.bf16.msra.mxu0 %v355
    %482 = vmatmul.bf16.gmra.mxu0 %v381
    %v483 = vpop.f32.mrf.mxu0
    %v484 = vadd.f32 %v297, %v483
    %v485 = vpop.f32.mrf.mxu0
    %486 = vdwg.mxu0
    %v487 = vld [vmem:[%s4] sm:$0xff]
    %v489 = vperm.slane %v487, 0
    %v490 = vperm.slane %v487, 1
    %v491 = vperm.slane %v487, 2
    %v492 = vperm.slane %v487, 3
    %v493 = vperm.slane %v487, 4
    %v494 = vperm.slane %v487, 5
    %v495 = vperm.slane %v487, 6
    %v496 = vperm.slane %v487, 7
    %v505 = vadd.f32 %v393, %v489
    %v506 = vadd.f32 %v406, %v490
    %v507 = vadd.f32 %v419, %v491
    %v508 = vadd.f32 %v432, %v492
    %v509 = vadd.f32 %v445, %v493
    %v510 = vadd.f32 %v458, %v494
    %v511 = vadd.f32 %v471, %v495
    %v512 = vadd.f32 %v484, %v496
    %v513 = vmax.f32 %v505, 0.0
    %v514 = vmax.f32 %v506, 0.0
    %v515 = vmax.f32 %v507, 0.0
    %v516 = vmax.f32 %v508, 0.0
    %v517 = vmax.f32 %v509, 0.0
    %v518 = vmax.f32 %v510, 0.0
    %v519 = vmax.f32 %v511, 0.0
    %v520 = vmax.f32 %v512, 0.0
    %v521 = vld [vmem:[%s6] sm:$0xff]
    %v522 = vld [vmem:[%s5] sm:$0xff]
    %524 = vset.pattern.permute.xlu0 0
    %525 = vperm.xlu0 %524, %v522
    %v526 = vpop.permute.xlu0 %525
    %v528 = vperm.slane %v513, 0
    %v529 = vperm.slane %v514, 0
    %v530 = vmul.f32 %v526, %v528
    %v531 = vmul.f32 %v526, %v529
    %533 = vset.pattern.permute.xlu0 0
    %534 = vperm.xlu0 %533, %v521
    %v535 = vpop.permute.xlu0 %534
    %v537 = vadd.f32 %v535, %v530
    %v538 = vadd.f32 %v535, %v531
    %s539 = scalar_lea.vmem %s5, 8
    %v540 = vld [vmem:[%s539] sm:$0xff]
    %542 = vset.pattern.permute.xlu0 0
    %543 = vperm.xlu0 %542, %v540
    %v544 = vpop.permute.xlu0 %543
    %v546 = vperm.slane %v515, 0
    %v547 = vperm.slane %v516, 0
    %v548 = vmul.f32 %v544, %v546
    %v549 = vmul.f32 %v544, %v547
    %v550 = vadd.f32 %v537, %v548
    %v551 = vadd.f32 %v538, %v549
    %s552 = scalar_lea.vmem %s5, 16
    %v553 = vld [vmem:[%s552] sm:$0xff]
    %555 = vset.pattern.permute.xlu0 0
    %556 = vperm.xlu0 %555, %v553
    %v557 = vpop.permute.xlu0 %556
    %v559 = vperm.slane %v517, 0
    %v560 = vperm.slane %v518, 0
    %v561 = vmul.f32 %v557, %v559
    %v562 = vmul.f32 %v557, %v560
    %v563 = vadd.f32 %v550, %v561
    %v564 = vadd.f32 %v551, %v562
    %s565 = scalar_lea.vmem %s5, 24
    %v566 = vld [vmem:[%s565] sm:$0xff]
    %568 = vset.pattern.permute.xlu0 0
    %569 = vperm.xlu0 %568, %v566
    %v570 = vpop.permute.xlu0 %569
    %v572 = vperm.slane %v519, 0
    %v573 = vperm.slane %v520, 0
    %v574 = vmul.f32 %v570, %v572
    %v575 = vmul.f32 %v570, %v573
    %v576 = vadd.f32 %v563, %v574
    %v577 = vadd.f32 %v564, %v575
    %v578 = vmax.f32 %v576, 0.0
    %v579 = vmax.f32 %v577, 0.0
    %v580 = vld [vmem:[%s7] sm:$0xff]
    %v581 = vld [vmem:[%s7 + $0x8] sm:$0xff]
    %v582 = vld [vmem:[%s8] sm:$0xff]
    %v583 = vld [vmem:[%s8 + $0x8] sm:$0xff]
    %585 = vset.pattern.permute.xlu0 0
    %586 = vperm.xlu0 %585, %v582
    %v587 = vpop.permute.xlu0 %586
    %590 = vset.pattern.permute.xlu0 0
    %591 = vperm.xlu0 %590, %v583
    %v592 = vpop.permute.xlu0 %591
    %vm594 = vcmask 64512
    %v596 = vsel %vm594, %v580, 0
    %v599 = vsel %vm594, %v581, 0
    %601 = vmatpush.msra.mxu0 0.0
    %602 = vmatpush.msra.mxu0 0.0
    %603 = vmatpush.msra.mxu0 0.0
    %604 = vmatpush.msra.mxu0 0.0
    %605 = vmatpush.msra.mxu0 0.0
    %606 = vmatpush.msra.mxu0 0.0
    %607 = vmatpush.msra.mxu0 0.0
    %608 = vmatpush.msra.mxu0 0.0
    %609 = vmatpush.msra.mxu0 0.0
    %610 = vmatpush.msra.mxu0 0.0
    %611 = vmatpush.msra.mxu0 0.0
    %612 = vmatpush.msra.mxu0 0.0
    %613 = vmatpush.msra.mxu0 0.0
    %614 = vmatpush.msra.mxu0 0.0
    %615 = vmatpush.msra.mxu0 0.0
    %616 = vmatpush.msra.mxu0 %v578
    %617 = vmatmul.f32.gmra.mxu0 %v596
    %v618 = vpop.f32.mrf.mxu0
    %v619 = vadd.f32 %v587, %v618
    %620 = vmatmul.f32.gmra.mxu0 %v599
    %v621 = vpop.f32.mrf.mxu0
    %v622 = vadd.f32 %v592, %v621
    %623 = vdwg.mxu0
    %624 = vmatpush.msra.mxu0 0.0
    %625 = vmatpush.msra.mxu0 0.0
    %626 = vmatpush.msra.mxu0 0.0
    %627 = vmatpush.msra.mxu0 0.0
    %628 = vmatpush.msra.mxu0 0.0
    %629 = vmatpush.msra.mxu0 0.0
    %630 = vmatpush.msra.mxu0 0.0
    %631 = vmatpush.msra.mxu0 0.0
    %632 = vmatpush.msra.mxu0 0.0
    %633 = vmatpush.msra.mxu0 0.0
    %634 = vmatpush.msra.mxu0 0.0
    %635 = vmatpush.msra.mxu0 0.0
    %636 = vmatpush.msra.mxu0 0.0
    %637 = vmatpush.msra.mxu0 0.0
    %638 = vmatpush.msra.mxu0 0.0
    %639 = vmatpush.msra.mxu0 %v579
    %640 = vmatmul.f32.gmra.mxu0 %v596
    %v641 = vpop.f32.mrf.mxu0
    %v642 = vadd.f32 %v587, %v641
    %643 = vmatmul.f32.gmra.mxu0 %v599
    %v644 = vpop.f32.mrf.mxu0
    %v645 = vadd.f32 %v592, %v644
    %646 = vdwg.mxu0
    %v647 = vmax.f32 %v619, %v642
    %v648 = vmax.f32 %v622, %v645
    %v649 = vmax.f32 %v647, %v648
    %650 = vmax.xlane.f32.xlu0 %v649
    %v651 = vpop.xlane.xlu0 %650
    %v652 = vrot.slane %v651, 4
    %v653 = vmax.f32 %v651, %v652
    %v654 = vrot.slane %v653, 2
    %v655 = vmax.f32 %v653, %v654
    %v656 = vrot.slane %v655, 1
    %v657 = vmax.f32 %v655, %v656
    %s658 = vtos %v657
    %v659 = vstv %s658
    %v660 = vsub.f32 %v619, %v659
    %v661 = vsub.f32 %v642, %v659
    %v662 = vsub.f32 %v622, %v659
    %v663 = vsub.f32 %v645, %v659
    %v664 = vmul.f32 %v660, 1.442695
    %v665 = vpow.pop %v664
    %v666 = vmul.f32 %v661, 1.442695
    %v667 = vpow.pop %v666
    %v668 = vmul.f32 %v662, 1.442695
    %v669 = vpow.pop %v668
    %v670 = vmul.f32 %v663, 1.442695
    %v671 = vpow.pop %v670
    %v672 = vadd.f32 %v665, %v667
    %v673 = vadd.f32 %v672, %v669
    %v674 = vadd.f32 %v673, %v671
    %675 = vadd.xlane.f32.xlu0 %v674
    %v676 = vpop.xlane.xlu0 %675
    %v677 = vrot.slane %v676, 4
    %v678 = vadd.f32 %v676, %v677
    %v679 = vrot.slane %v678, 2
    %v680 = vadd.f32 %v678, %v679
    %v681 = vrot.slane %v680, 1
    %v682 = vadd.f32 %v680, %v681
    %s683 = vtos %v682
    %v684 = vstv %s683
    %v685 = vrcp.pop %v684
    %v686 = vmul.f32 %v684, %v685
    %v687 = vsub.f32 1.0, %v686
    %v688 = vmul.f32 %v685, %v687
    %v689 = vadd.f32 %v685, %v688
    %vm690 = vweird.f32 %v684
    %vm691 = vweird.f32 %v685
    %vm692 = vmor %vm690, %vm691
    %v693 = vsel %vm692, %v685, %v689
    %v694 = vand.u32 2147483647, %v684
    %vm695 = vcmp.eq.f32.partialorder %v694, 8.507059e+37
    %v696 = vand.u32 %v684, 2147483648
    %v697 = vor.u32 1.1754944e-38, %v696
    %v698 = vsel %vm695, %v697, %v693
    %s699 = vtos %v698
    %v700 = vstv %s699
    %v701 = vmul.f32 %v665, %v700
    %v702 = vmul.f32 %v667, %v700
    %v703 = vmul.f32 %v669, %v700
    %v704 = vmul.f32 %v671, %v700
    %705 = vst [vmem:[%s9] sm:$0xff] %v701
    %706 = vst [vmem:[%s9 + $0x8] sm:$0xff] %v702
    %707 = vst [vmem:[%s9 + $0x10] sm:$0xff] %v703
    %708 = vst [vmem:[%s9 + $0x18] sm:$0xff] %v704
    // Predicated region
    $region46: #{placenet_forward.1} parent=1 // pred_check
      _
    $region47: #{placenet_forward.1} parent=1 // pred_check_branch
      %710 = sbr.rel (0) target = $region49
    $region48: #{placenet_forward.1} parent=1 // pred_region
      _
    $region49: #{placenet_forward.1} parent=1 // pred_fallthru
      _
    // Predicated region
    $region50: #{placenet_forward.1} parent=1 // pred_check
      _
    $region51: #{placenet_forward.1} parent=1 // pred_check_branch
      %712 = sbr.rel (0) target = $region53
    $region52: #{placenet_forward.1} parent=1 // pred_region
      _
    $region53: #{placenet_forward.1} parent=1 // pred_fallthru
      _
    %713 = vsyncpa [#allocation4], 1
    %714 = vsyncpa [#allocation6], 1

</llo_original>
